<compile_context>
chip_gen: v7x
topology: tpu7x:2x2x1
jax: 0.10.0
libtpu: 0.0.40
codegen_flags: <defaults>
</compile_context>

<pallas_src>
import functools
import math

import jax
import jax.numpy as jnp
from jax import lax
from jax.experimental import pallas as pl
from jax.experimental.pallas import tpu as pltpu

HIDDEN = 256


def _round_up(x, m):
    return (x + m - 1) // m * m


def _ppo_kernel(x_ref, w1_ref, w2_ref, w3_ref, b_ref, out_ref, *, out_dim):
    """One batch tile of the fused actor+critic forward pass."""
    wdt = w1_ref.dtype
    out_lanes = out_ref.shape[-1]

    x = x_ref[...].astype(wdt)

    # ---- layer 1, fused across branches:  x @ [aw1 | cw1] + [ab1 | cb1] ----
    b1 = b_ref[0:1, : 2 * HIDDEN]                                   # (1, 512)
    h1 = jnp.dot(x, w1_ref[...], preferred_element_type=jnp.float32) + b1
    h1 = jnp.maximum(h1, 0.0)
    h1a = h1[:, :HIDDEN].astype(wdt)                                # actor hidden
    h1c = h1[:, HIDDEN:].astype(wdt)                                # critic hidden

    # ---- layer 2, per-branch (different LHS; both weights share one DMA) ----
    b2a = b_ref[1:2, :HIDDEN]
    b2c = b_ref[1:2, HIDDEN: 2 * HIDDEN]
    h2a = jnp.maximum(
        jnp.dot(h1a, w2_ref[0], preferred_element_type=jnp.float32) + b2a, 0.0)
    h2c = jnp.maximum(
        jnp.dot(h1c, w2_ref[1], preferred_element_type=jnp.float32) + b2c, 0.0)

    # ---- layer 3, fused block matmul straight into a lane-dense slab --------
    #   [h2a | h2c] @ [[aw3, 0, 0], [0, cw3, 0]] + [ab3, cb3, 0]
    h2 = jnp.concatenate([h2a.astype(wdt), h2c.astype(wdt)], axis=-1)  # (bm, 512)
    b3 = b_ref[2:3, :out_lanes]
    raw = jnp.dot(h2, w3_ref[...], preferred_element_type=jnp.float32) + b3

    # masked softmax over the logit lanes; the value lane passes through.
    lane = lax.broadcasted_iota(jnp.int32, raw.shape, 1)
    is_logit = lane < out_dim
    masked = jnp.where(is_logit, raw, -jnp.inf)
    m = jnp.max(masked, axis=-1, keepdims=True)
    e = jnp.exp(masked - m)                          # non-logit lanes -> exp(-inf) = 0
    denom = jnp.sum(e, axis=-1, keepdims=True)
    prob = e * pl.reciprocal(denom, approx=False)    # exact normalization

    out_ref[...] = jnp.where(is_logit, prob,
                             jnp.where(lane == out_dim, raw, 0.0))


def pack_params(params, dtype=jnp.float32):
    """Pack 12 per-layer tensors into 4 contiguous buffers (4 param DMAs).

    Use dtype=jnp.bfloat16 to halve weight HBM->VMEM bytes (MXU-native path);
    biases always stay f32 (added after the f32-accumulated dot).
    """
    aw1, ab1 = params["aw1"], params["ab1"]
    aw2, ab2 = params["aw2"], params["ab2"]
    aw3, ab3 = params["aw3"], params["ab3"]
    cw1, cb1 = params["cw1"], params["cb1"]
    cw2, cb2 = params["cw2"], params["cb2"]
    cw3, cb3 = params["cw3"], params["cb3"]

    out_dim = aw3.shape[1]
    out_lanes = _round_up(out_dim + 1, 128)          # lane-dense output slab width
    bias_cols = max(2 * HIDDEN, out_lanes)

    # layer 1: fused along the output axis.
    w1 = jnp.concatenate([aw1, cw1], axis=1).astype(dtype)           # (in, 512)
    # layer 2: stacked so both branch weights ride one DMA.
    w2 = jnp.stack([aw2, cw2], axis=0).astype(dtype)                 # (2, 256, 256)
    # layer 3: block-structured and zero-padded to the slab width.
    w3 = jnp.zeros((2 * HIDDEN, out_lanes), jnp.float32)
    w3 = w3.at[:HIDDEN, :out_dim].set(aw3)
    w3 = w3.at[HIDDEN:, out_dim].set(cw3[:, 0])
    w3 = w3.astype(dtype)                                            # (512, out_lanes)

    b = jnp.zeros((3, bias_cols), jnp.float32)
    b = b.at[0, : 2 * HIDDEN].set(jnp.concatenate([ab1, cb1]))
    b = b.at[1, :HIDDEN].set(ab2)
    b = b.at[1, HIDDEN: 2 * HIDDEN].set(cb2)
    b = b.at[2, :out_dim].set(ab3)
    b = b.at[2, out_dim].set(cb3[0])
    return dict(w1=w1, w2=w2, w3=w3, b=b)


@functools.partial(jax.jit, static_argnames=("out_dim", "block_b"))
def ppo_split_forward(x, packed, *, out_dim, block_b=128):
    """x: (B, in_dim) f32.  Returns (prob (B, out_dim), value (B, 1)) in f32."""
    B, in_dim = x.shape
    out_lanes = packed["w3"].shape[1]

    # batch tile (multiple of 8); pad B up so the grid divides evenly.
    bm = min(block_b, _round_up(B, 8))
    Bp = _round_up(B, bm)
    xp = x if Bp == B else jnp.pad(x, ((0, Bp - B), (0, 0)))
    grid = (Bp // bm,)

    def _const(arr):                      # weight stays on the same block -> resident
        nd = arr.ndim
        return pl.BlockSpec(arr.shape, lambda i, _nd=nd: (0,) * _nd)

    slab = pl.pallas_call(
        functools.partial(_ppo_kernel, out_dim=out_dim),
        out_shape=jax.ShapeDtypeStruct((Bp, out_lanes), jnp.float32),
        grid=grid,
        in_specs=[
            pl.BlockSpec((bm, in_dim), lambda i: (i, 0)),   # x tiles over batch
            _const(packed["w1"]),
            _const(packed["w2"]),
            _const(packed["w3"]),
            _const(packed["b"]),
        ],
        out_specs=pl.BlockSpec((bm, out_lanes), lambda i: (i, 0)),
        compiler_params=pltpu.CompilerParams(
            dimension_semantics=("parallel",)),   # v7x: shard batch tiles across 2 TCs
    )(xp, packed["w1"], packed["w2"], packed["w3"], packed["b"])

    prob = slab[:B, :out_dim]
    value = slab[:B, out_dim: out_dim + 1]
    return prob, value


# ----------------------------- init & reference ------------------------------

def _init_linear(key, fan_in, fan_out):
    """torch.nn.Linear default init: U(-1/sqrt(fan_in), 1/sqrt(fan_in))."""
    kw, kb = jax.random.split(key)
    bound = 1.0 / math.sqrt(fan_in)
    w = jax.random.uniform(kw, (fan_in, fan_out), jnp.float32, -bound, bound)
    b = jax.random.uniform(kb, (fan_out,), jnp.float32, -bound, bound)
    return w, b


def init_params(key, in_dim, out_dim):
    keys = jax.random.split(key, 6)
    aw1, ab1 = _init_linear(keys[0], in_dim, HIDDEN)
    aw2, ab2 = _init_linear(keys[1], HIDDEN, HIDDEN)
    aw3, ab3 = _init_linear(keys[2], HIDDEN, out_dim)
    cw1, cb1 = _init_linear(keys[3], in_dim, HIDDEN)
    cw2, cb2 = _init_linear(keys[4], HIDDEN, HIDDEN)
    cw3, cb3 = _init_linear(keys[5], HIDDEN, 1)
    return dict(aw1=aw1, ab1=ab1, aw2=aw2, ab2=ab2, aw3=aw3, ab3=ab3,
                cw1=cw1, cb1=cb1, cw2=cw2, cb2=cb2, cw3=cw3, cb3=cb3)


def _reference_forward(x, p):
    h = jax.nn.relu(x @ p["aw1"] + p["ab1"])
    h = jax.nn.relu(h @ p["aw2"] + p["ab2"])
    prob = jax.nn.softmax(h @ p["aw3"] + p["ab3"], axis=-1)
    g = jax.nn.relu(x @ p["cw1"] + p["cb1"])
    g = jax.nn.relu(g @ p["cw2"] + p["cb2"])
    value = g @ p["cw3"] + p["cb3"]
    return prob, value


# TODO(synk): train_net / act / Adam optimizer / Categorical sampling are RL
# host-side training utilities, not part of the forward pass — not ported.

if __name__ == "__main__":
    IN_DIM, OUT_DIM = 32, 8

    key = jax.random.PRNGKey(0)
    k_x1, k_x2, k_p = jax.random.split(key, 3)
    params = init_params(k_p, IN_DIM, OUT_DIM)
    packed = pack_params(params)   # f32 (use dtype=jnp.bfloat16 to halve weight DMA)

    # --- small batch: single grid step ---
    x1 = jax.random.normal(k_x1, (8, IN_DIM), jnp.float32)
    prob1, val1 = ppo_split_forward(x1, packed, out_dim=OUT_DIM)
    jax.block_until_ready((prob1, val1))
    rp1, rv1 = _reference_forward(x1, params)
    assert prob1.shape == (8, OUT_DIM) and val1.shape == (8, 1)
    assert jnp.allclose(prob1, rp1, atol=1e-5, rtol=1e-5)
    assert jnp.allclose(val1, rv1, atol=1e-5, rtol=1e-5)

    # --- ragged batch: exercises the batch grid + padding (bm=16, grid=3) ---
    x2 = jax.random.normal(k_x2, (40, IN_DIM), jnp.float32)
    prob2, val2 = ppo_split_forward(x2, packed, out_dim=OUT_DIM, block_b=16)
    jax.block_until_ready((prob2, val2))
    rp2, rv2 = _reference_forward(x2, params)
    assert prob2.shape == (40, OUT_DIM) and val2.shape == (40, 1)
    assert jnp.allclose(prob2, rp2, atol=1e-5, rtol=1e-5)
    assert jnp.allclose(val2, rv2, atol=1e-5, rtol=1e-5)

    print("KERNEL_OK")
</pallas_src>

<mosaic_0001>
module attributes {stable_mosaic.version = 11 : i64} {
  func.func @_ppo_kernel(%arg0: i32, %arg1: memref<8x32xf32, #tpu.memory_space<vmem>>, %arg2: memref<32x512xf32, #tpu.memory_space<vmem>>, %arg3: memref<2x256x256xf32, #tpu.memory_space<vmem>>, %arg4: memref<512x128xf32, #tpu.memory_space<vmem>>, %arg5: memref<3x512xf32, #tpu.memory_space<vmem>>, %arg6: memref<8x128xf32, #tpu.memory_space<vmem>>) attributes {dimension_semantics = [#tpu.dimension_semantics<parallel>], iteration_bounds = array<i64: 1>, scalar_prefetch = 0 : i64, scratch_operands = 0 : i64, tpu.core_type = #tpu.core_type<tc>, window_params = [{transform_indices = @transform_0, window_bounds = array<i64: 8, 32>}, {pipeline_mode = #tpu.pipeline_mode<synchronous>, transform_indices = @transform_1, window_bounds = array<i64: 32, 512>}, {pipeline_mode = #tpu.pipeline_mode<synchronous>, transform_indices = @transform_2, window_bounds = array<i64: 2, 256, 256>}, {pipeline_mode = #tpu.pipeline_mode<synchronous>, transform_indices = @transform_3, window_bounds = array<i64: 512, 128>}, {pipeline_mode = #tpu.pipeline_mode<synchronous>, transform_indices = @transform_4, window_bounds = array<i64: 3, 512>}, {transform_indices = @transform_5, window_bounds = array<i64: 8, 128>}]} {
    %c0 = arith.constant 0 : index
    %c0_0 = arith.constant 0 : index
    %0 = vector.load %arg1[%c0, %c0_0] : memref<8x32xf32, #tpu.memory_space<vmem>>, vector<8x32xf32>
    %c0_1 = arith.constant 0 : index
    %c0_2 = arith.constant 0 : index
    %1 = vector.load %arg5[%c0_1, %c0_2] : memref<3x512xf32, #tpu.memory_space<vmem>>, vector<1x512xf32>
    %c0_3 = arith.constant 0 : index
    %c0_4 = arith.constant 0 : index
    %2 = vector.load %arg2[%c0_3, %c0_4] : memref<32x512xf32, #tpu.memory_space<vmem>>, vector<32x512xf32>
    %cst = arith.constant dense<0.000000e+00> : vector<8x512xf32>
    %3 = tpu.matmul %0, %2, %cst {dimension_numbers = #tpu.dot_dimension_numbers<[1], [0], [0], [1], [0, 0, 1, 1], [], []>} : vector<8x32xf32>, vector<32x512xf32>, vector<8x512xf32> -> vector<8x512xf32>
    %4 = vector.broadcast %1 : vector<1x512xf32> to vector<8x512xf32>
    %5 = arith.addf %3, %4 : vector<8x512xf32>
    %cst_5 = arith.constant 0.000000e+00 : f32
    %6 = vector.broadcast %cst_5 : f32 to vector<8x512xf32>
    %7 = arith.maximumf %5, %6 : vector<8x512xf32>
    %8 = vector.extract_strided_slice %7 {offsets = [0, 0], sizes = [8, 256], strides = [1, 1]} : vector<8x512xf32> to vector<8x256xf32>
    %9 = vector.extract_strided_slice %7 {offsets = [0, 256], sizes = [8, 256], strides = [1, 1]} : vector<8x512xf32> to vector<8x256xf32>
    %c1 = arith.constant 1 : index
    %c0_6 = arith.constant 0 : index
    %10 = vector.load %arg5[%c1, %c0_6] : memref<3x512xf32, #tpu.memory_space<vmem>>, vector<1x256xf32>
    %c1_7 = arith.constant 1 : index
    %c256 = arith.constant 256 : index
    %11 = vector.load %arg5[%c1_7, %c256] : memref<3x512xf32, #tpu.memory_space<vmem>>, vector<1x256xf32>
    %c0_8 = arith.constant 0 : index
    %c0_9 = arith.constant 0 : index
    %c0_10 = arith.constant 0 : index
    %12 = vector.load %arg3[%c0_8, %c0_9, %c0_10] : memref<2x256x256xf32, #tpu.memory_space<vmem>>, vector<1x256x256xf32>
    %13 = vector.shape_cast %12 : vector<1x256x256xf32> to vector<256x256xf32>
    %cst_11 = arith.constant dense<0.000000e+00> : vector<8x256xf32>
    %14 = tpu.matmul %8, %13, %cst_11 {dimension_numbers = #tpu.dot_dimension_numbers<[1], [0], [0], [1], [0, 0, 1, 1], [], []>} : vector<8x256xf32>, vector<256x256xf32>, vector<8x256xf32> -> vector<8x256xf32>
    %15 = vector.broadcast %10 : vector<1x256xf32> to vector<8x256xf32>
    %16 = arith.addf %14, %15 : vector<8x256xf32>
    %cst_12 = arith.constant 0.000000e+00 : f32
    %17 = vector.broadcast %cst_12 : f32 to vector<8x256xf32>
    %18 = arith.maximumf %16, %17 : vector<8x256xf32>
    %c1_13 = arith.constant 1 : index
    %c0_14 = arith.constant 0 : index
    %c0_15 = arith.constant 0 : index
    %19 = vector.load %arg3[%c1_13, %c0_14, %c0_15] : memref<2x256x256xf32, #tpu.memory_space<vmem>>, vector<1x256x256xf32>
    %20 = vector.shape_cast %19 : vector<1x256x256xf32> to vector<256x256xf32>
    %cst_16 = arith.constant dense<0.000000e+00> : vector<8x256xf32>
    %21 = tpu.matmul %9, %20, %cst_16 {dimension_numbers = #tpu.dot_dimension_numbers<[1], [0], [0], [1], [0, 0, 1, 1], [], []>} : vector<8x256xf32>, vector<256x256xf32>, vector<8x256xf32> -> vector<8x256xf32>
    %22 = vector.broadcast %11 : vector<1x256xf32> to vector<8x256xf32>
    %23 = arith.addf %21, %22 : vector<8x256xf32>
    %cst_17 = arith.constant 0.000000e+00 : f32
    %24 = vector.broadcast %cst_17 : f32 to vector<8x256xf32>
    %25 = arith.maximumf %23, %24 : vector<8x256xf32>
    %26 = tpu.concatenate %18, %25 in 1 : vector<8x256xf32>, vector<8x256xf32> -> vector<8x512xf32>
    %c2 = arith.constant 2 : index
    %c0_18 = arith.constant 0 : index
    %27 = vector.load %arg5[%c2, %c0_18] : memref<3x512xf32, #tpu.memory_space<vmem>>, vector<1x128xf32>
    %c0_19 = arith.constant 0 : index
    %c0_20 = arith.constant 0 : index
    %28 = vector.load %arg4[%c0_19, %c0_20] : memref<512x128xf32, #tpu.memory_space<vmem>>, vector<512x128xf32>
    %cst_21 = arith.constant dense<0.000000e+00> : vector<8x128xf32>
    %29 = tpu.matmul %26, %28, %cst_21 {dimension_numbers = #tpu.dot_dimension_numbers<[1], [0], [0], [1], [0, 0, 1, 1], [], []>} : vector<8x512xf32>, vector<512x128xf32>, vector<8x128xf32> -> vector<8x128xf32>
    %30 = vector.broadcast %27 : vector<1x128xf32> to vector<8x128xf32>
    %31 = arith.addf %29, %30 : vector<8x128xf32>
    %32 = tpu.iota {dimensions = array<i32: 1>} : vector<8x128xi32>
    %c8_i32 = arith.constant 8 : i32
    %33 = vector.broadcast %c8_i32 : i32 to vector<8x128xi32>
    %34 = arith.cmpi slt, %32, %33 : vector<8x128xi32>
    %cst_22 = arith.constant 0xFF800000 : f32
    %35 = vector.broadcast %cst_22 : f32 to vector<8x128xf32>
    %36 = arith.select %34, %31, %35 : vector<8x128xi1>, vector<8x128xf32>
    %cst_23 = arith.constant dense<0xFF800000> : vector<8xf32>
    %37 = vector.multi_reduction <maximumf>, %36, %cst_23 [1] : vector<8x128xf32> to vector<8xf32>
    %38 = vector.shape_cast %37 : vector<8xf32> to vector<8x1xf32>
    %39 = vector.broadcast %38 : vector<8x1xf32> to vector<8x128xf32>
    %40 = arith.subf %36, %39 : vector<8x128xf32>
    %41 = math.exp %40 : vector<8x128xf32>
    %cst_24 = arith.constant dense<0.000000e+00> : vector<8xf32>
    %42 = vector.multi_reduction <add>, %41, %cst_24 [1] : vector<8x128xf32> to vector<8xf32>
    %43 = vector.shape_cast %42 : vector<8xf32> to vector<8x1xf32>
    %44 = tpu.reciprocal %43 : vector<8x1xf32> -> vector<8x1xf32>
    %45 = vector.broadcast %44 : vector<8x1xf32> to vector<8x128xf32>
    %46 = arith.mulf %41, %45 : vector<8x128xf32>
    %c8_i32_25 = arith.constant 8 : i32
    %47 = vector.broadcast %c8_i32_25 : i32 to vector<8x128xi32>
    %48 = arith.cmpi eq, %32, %47 : vector<8x128xi32>
    %cst_26 = arith.constant 0.000000e+00 : f32
    %49 = vector.broadcast %cst_26 : f32 to vector<8x128xf32>
    %50 = arith.select %48, %31, %49 : vector<8x128xi1>, vector<8x128xf32>
    %51 = arith.select %34, %46, %50 : vector<8x128xi1>, vector<8x128xf32>
    %c0_27 = arith.constant 0 : index
    %c0_28 = arith.constant 0 : index
    %52 = vector.load %arg6[%c0_27, %c0_28] : memref<8x128xf32, #tpu.memory_space<vmem>>, vector<8x128xf32>
    tpu.vector_store %arg6[%c0_27, %c0_28], %51 {strides = array<i32>} : memref<8x128xf32, #tpu.memory_space<vmem>>, vector<8x128xf32>,
    return
  }
  func.func @transform_0(%arg0: i32) -> (i32, i32) {
    %c0_i32 = arith.constant 0 : i32
    %c0_i32_0 = arith.constant 0 : i32
    return %arg0, %c0_i32 : i32, i32
  }
  func.func @transform_1(%arg0: i32) -> (i32, i32) {
    %c0_i32 = arith.constant 0 : i32
    %c0_i32_0 = arith.constant 0 : i32
    %c0_i32_1 = arith.constant 0 : i32
    return %c0_i32, %c0_i32_0 : i32, i32
  }
  func.func @transform_2(%arg0: i32) -> (i32, i32, i32) {
    %c0_i32 = arith.constant 0 : i32
    %c0_i32_0 = arith.constant 0 : i32
    %c0_i32_1 = arith.constant 0 : i32
    %c0_i32_2 = arith.constant 0 : i32
    return %c0_i32, %c0_i32_0, %c0_i32_1 : i32, i32, i32
  }
  func.func @transform_3(%arg0: i32) -> (i32, i32) {
    %c0_i32 = arith.constant 0 : i32
    %c0_i32_0 = arith.constant 0 : i32
    %c0_i32_1 = arith.constant 0 : i32
    return %c0_i32, %c0_i32_0 : i32, i32
  }
  func.func @transform_4(%arg0: i32) -> (i32, i32) {
    %c0_i32 = arith.constant 0 : i32
    %c0_i32_0 = arith.constant 0 : i32
    %c0_i32_1 = arith.constant 0 : i32
    return %c0_i32, %c0_i32_0 : i32, i32
  }
  func.func @transform_5(%arg0: i32) -> (i32, i32) {
    %c0_i32 = arith.constant 0 : i32
    %c0_i32_0 = arith.constant 0 : i32
    return %arg0, %c0_i32 : i32, i32
  }
}

</mosaic_0001>

<llo_original>
// kernel: ppo_split_forward.1
$region0: #{ppo_split_forward.1}
  #allocation0 [shape = 'u32[]', space=smem, size = 0x4, offset = 0x4, fixed_abs, tag = 'smem constant byte address 0x4 - core index']
  #allocation1 [shape = 'u32[144,128]{1,0:T(1,128)}', space=vmem, size = 0x12000, scoped, tag = 'internal scratch']
  %s0 = inlined_call_operand.hbm [shape: f32[8,32], index: 0, kind: input, shape index: {}]
  %s1 = inlined_call_operand.hbm [shape: f32[32,512], index: 1, kind: input, shape index: {}]
  %s2 = inlined_call_operand.hbm [shape: f32[2,256,256], index: 2, kind: input, shape index: {}]
  %s3 = inlined_call_operand.hbm [shape: f32[512,128], index: 3, kind: input, shape index: {}]
  %s4 = inlined_call_operand.hbm [shape: f32[3,512], index: 4, kind: input, shape index: {}]
  %s5 = inlined_call_operand.vmem [shape: f32[8,128], index: 5, kind: output, shape index: {}]
  %s6 = sld [smem:[#allocation0]]
  $region50: #{ppo_split_forward.1} parent=0
    _
  %s8 = ssub.s32 1, %s6
  %s9 = scalar_select 0, %s8, %s6
  $region1: #{ppo_split_forward.1} parent=0
    #allocation2 [shape = 'u8[4096]{0}', space=vmem, size = 0x1000, scoped, tag = 'input window, operand 0, single buffered']
    #allocation3 [shape = 's32[1]{0}', space=sflag, size = 0x4, scoped, tag = 'scoped memory for ppo_split_forward.1']
    #allocation4 [shape = 'u8[65536]{0}', space=vmem, size = 0x10000, scoped, tag = 'input window, operand 1, single buffered']
    #allocation5 [shape = 's32[1]{0}', space=sflag, size = 0x4, scoped, tag = 'scoped memory for ppo_split_forward.1']
    #allocation6 [shape = 'u8[524288]{0}', space=vmem, size = 0x80000, scoped, tag = 'input window, operand 2, single buffered']
    #allocation7 [shape = 'u8[262144]{0}', space=vmem, size = 0x40000, scoped, tag = 'input window, operand 3, single buffered']
    #allocation8 [shape = 's32[1]{0}', space=sflag, size = 0x4, scoped, tag = 'scoped memory for ppo_split_forward.1']
    #allocation9 [shape = 'u8[8192]{0}', space=vmem, size = 0x2000, scoped, tag = 'input window, operand 4, single buffered']
    %10 = vsyncpa [#allocation3], 0
    %11 = vsyncpa [#allocation5], 0
    %12 = vsyncpa [#allocation8], 0
    // Predicated region
    $region2: #{ppo_split_forward.1} parent=1 // pred_check
      _
    $region3: #{ppo_split_forward.1} parent=1 // pred_check_branch
      %14 = sbr.rel (0) target = $region5
    $region4: #{ppo_split_forward.1} parent=1 // pred_region
      %s16 = ssub.s32 128, 128
      %17 = vsyncadd [#allocation3], %s16
      %s19 = sshll.u32 [#allocation2], 4
      %s20 = int_to_ptr.vmem [resolvable:$true] %s19
      %22 = dma.hbm_to_vmem [thread:$0]  %s0, 128, %s20, [#allocation3]
    $region5: #{ppo_split_forward.1} parent=1 // pred_fallthru
      _
    // Predicated region
    $region6: #{ppo_split_forward.1} parent=1 // pred_check
      _
    $region7: #{ppo_split_forward.1} parent=1 // pred_check_branch
      %24 = sbr.rel (0) target = $region9
    $region8: #{ppo_split_forward.1} parent=1 // pred_region
      %s26 = ssub.s32 2048, 2048
      %27 = vsyncadd [#allocation5], %s26
      %s28 = sshll.u32 [#allocation4], 4
      %s29 = int_to_ptr.vmem [resolvable:$true] %s28
      %34 = dma.hbm_to_vmem [thread:$0]  %s1, 2048, %s29, [#allocation5], 512, 512, 32
    $region9: #{ppo_split_forward.1} parent=1 // pred_fallthru
      _
    // Predicated region
    $region10: #{ppo_split_forward.1} parent=1 // pred_check
      _
    $region11: #{ppo_split_forward.1} parent=1 // pred_check_branch
      %36 = sbr.rel (0) target = $region13
    $region12: #{ppo_split_forward.1} parent=1 // pred_region
      %s38 = ssub.s32 16384, 16384
      %39 = vsyncadd [#allocation5], %s38
      %s40 = sshll.u32 [#allocation6], 4
      %s41 = int_to_ptr.vmem [resolvable:$true] %s40
      %46 = dma.hbm_to_vmem [thread:$0]  %s2, 16384, %s41, [#allocation5], 256, 256, 16
    $region13: #{ppo_split_forward.1} parent=1 // pred_fallthru
      _
    // Predicated region
    $region14: #{ppo_split_forward.1} parent=1 // pred_check
      _
    $region15: #{ppo_split_forward.1} parent=1 // pred_check_branch
      %48 = sbr.rel (0) target = $region17
    $region16: #{ppo_split_forward.1} parent=1 // pred_region
      %s50 = ssub.s32 8192, 8192
      %51 = vsyncadd [#allocation8], %s50
      %s52 = sshll.u32 [#allocation7], 4
      %s53 = int_to_ptr.vmem [resolvable:$true] %s52
      %58 = dma.hbm_to_vmem [thread:$0]  %s3, 8192, %s53, [#allocation8], 128, 128, 8
    $region17: #{ppo_split_forward.1} parent=1 // pred_fallthru
      _
    // Predicated region
    $region18: #{ppo_split_forward.1} parent=1 // pred_check
      _
    $region19: #{ppo_split_forward.1} parent=1 // pred_check_branch
      %60 = sbr.rel (0) target = $region21
    $region20: #{ppo_split_forward.1} parent=1 // pred_region
      %s62 = ssub.s32 256, 256
      %63 = vsyncadd [#allocation8], %s62
      %s65 = sshll.u32 [#allocation9], 4
      %s66 = int_to_ptr.vmem [resolvable:$true] %s65
      %68 = dma.hbm_to_vmem [thread:$0]  %s4, 256, %s66, [#allocation8]
    $region21: #{ppo_split_forward.1} parent=1 // pred_fallthru
      _
    // Predicated region
    $region22: #{ppo_split_forward.1} parent=1 // pred_check
      _
    $region23: #{ppo_split_forward.1} parent=1 // pred_check_branch
      %70 = sbr.rel (0) target = $region25
    $region24: #{ppo_split_forward.1} parent=1 // pred_region
      %71 = dma.done [#allocation3], 128
    $region25: #{ppo_split_forward.1} parent=1 // pred_fallthru
      _
    // Predicated region
    $region26: #{ppo_split_forward.1} parent=1 // pred_check
      _
    $region27: #{ppo_split_forward.1} parent=1 // pred_check_branch
      %73 = sbr.rel (0) target = $region29
    $region28: #{ppo_split_forward.1} parent=1 // pred_region
      %74 = dma.done [#allocation5], 2048
    $region29: #{ppo_split_forward.1} parent=1 // pred_fallthru
      _
    // Predicated region
    $region30: #{ppo_split_forward.1} parent=1 // pred_check
      _
    $region31: #{ppo_split_forward.1} parent=1 // pred_check_branch
      %76 = sbr.rel (0) target = $region33
    $region32: #{ppo_split_forward.1} parent=1 // pred_region
      %77 = dma.done [#allocation5], 16384
    $region33: #{ppo_split_forward.1} parent=1 // pred_fallthru
      _
    // Predicated region
    $region34: #{ppo_split_forward.1} parent=1 // pred_check
      _
    $region35: #{ppo_split_forward.1} parent=1 // pred_check_branch
      %79 = sbr.rel (0) target = $region37
    $region36: #{ppo_split_forward.1} parent=1 // pred_region
      %80 = dma.done [#allocation8], 8192
    $region37: #{ppo_split_forward.1} parent=1 // pred_fallthru
      _
    // Predicated region
    $region38: #{ppo_split_forward.1} parent=1 // pred_check
      _
    $region39: #{ppo_split_forward.1} parent=1 // pred_check_branch
      %82 = sbr.rel (0) target = $region41
    $region40: #{ppo_split_forward.1} parent=1 // pred_region
      %83 = dma.done [#allocation8], 256
    $region41: #{ppo_split_forward.1} parent=1 // pred_fallthru
      _
    %v84 = vld [vmem:[#allocation2] sm:$0xff]
    %v85 = vld [vmem:[#allocation9] ss:$4 sm:$0xf]
    %v86 = vld [vmem:[#allocation4] sm:$0xff]
    %v87 = vld [vmem:[#allocation4 + $0x8] sm:$0xff]
    %v88 = vld [vmem:[#allocation4 + $0x10] sm:$0xff]
    %v89 = vld [vmem:[#allocation4 + $0x18] sm:$0xff]
    %v90 = vld [vmem:[#allocation4 + $0x20] sm:$0xff]
    %v91 = vld [vmem:[#allocation4 + $0x28] sm:$0xff]
    %v92 = vld [vmem:[#allocation4 + $0x30] sm:$0xff]
    %v93 = vld [vmem:[#allocation4 + $0x38] sm:$0xff]
    %v94 = vld [vmem:[#allocation4 + $0x40] sm:$0xff]
    %v95 = vld [vmem:[#allocation4 + $0x48] sm:$0xff]
    %v96 = vld [vmem:[#allocation4 + $0x50] sm:$0xff]
    %v97 = vld [vmem:[#allocation4 + $0x58] sm:$0xff]
    %v98 = vld [vmem:[#allocation4 + $0x60] sm:$0xff]
    %v99 = vld [vmem:[#allocation4 + $0x68] sm:$0xff]
    %v100 = vld [vmem:[#allocation4 + $0x70] sm:$0xff]
    %v101 = vld [vmem:[#allocation4 + $0x78] sm:$0xff]
    %v103 = vlaneseq
    %v104 = vshrl.u32 %v103, 7
    %v105 = vsub.s32 0, %v104
    %v106 = vrot.slane %v85, %v105
    %v107 = vlaneseq
    %v108 = vshrl.u32 %v107, 7
    %v109 = vsub.s32 1, %v108
    %v110 = vrot.slane %v85, %v109
    %v111 = vlaneseq
    %v112 = vshrl.u32 %v111, 7
    %v113 = vsub.s32 2, %v112
    %v114 = vrot.slane %v85, %v113
    %v115 = vlaneseq
    %v116 = vshrl.u32 %v115, 7
    %v117 = vsub.s32 3, %v116
    %v118 = vrot.slane %v85, %v117
    %vm123 = vcmask 261120
    %v125 = vsel %vm123, %v84, 0
    %127 = vmatprep.subr.mxu0 %v87
    %128 = vmatpush1.msra.mxu0 %v86
    %129 = vmatprep.subr.mxu0 %v91
    %130 = vmatpush1.msra.mxu0 %v90
    %131 = vmatprep.subr.mxu0 %v95
    %132 = vmatpush1.msra.mxu0 %v94
    %133 = vmatprep.subr.mxu0 %v99
    %134 = vmatpush1.msra.mxu0 %v98
    %135 = vmatprep.subr.mxu0 0.0
    %136 = vmatpush1.msra.mxu0 0.0
    %137 = vmatprep.subr.mxu0 0.0
    %138 = vmatpush1.msra.mxu0 0.0
    %139 = vmatprep.subr.mxu0 0.0
    %140 = vmatpush1.msra.mxu0 0.0
    %141 = vmatprep.subr.mxu0 0.0
    %142 = vmatpush1.msra.mxu0 0.0
    %143 = vmatprep.subr.mxu0 0.0
    %144 = vmatpush1.msra.mxu0 0.0
    %145 = vmatprep.subr.mxu0 0.0
    %146 = vmatpush1.msra.mxu0 0.0
    %147 = vmatprep.subr.mxu0 0.0
    %148 = vmatpush1.msra.mxu0 0.0
    %149 = vmatprep.subr.mxu0 0.0
    %150 = vmatpush1.msra.mxu0 0.0
    %151 = vmatprep.subr.mxu0 0.0
    %152 = vmatpush1.msra.mxu0 0.0
    %153 = vmatprep.subr.mxu0 0.0
    %154 = vmatpush1.msra.mxu0 0.0
    %155 = vmatprep.subr.mxu0 0.0
    %156 = vmatpush1.msra.mxu0 0.0
    %157 = vmatprep.subr.mxu0 0.0
    %158 = vmatpush1.msra.mxu0 0.0
    %159 = vmatprep.subr.mxu0 0.0
    %160 = vmatpush1.msra.mxu0 0.0
    %161 = vmatprep.subr.mxu0 0.0
    %162 = vmatpush1.msra.mxu0 0.0
    %163 = vmatprep.subr.mxu0 0.0
    %164 = vmatpush1.msra.mxu0 0.0
    %165 = vmatprep.subr.mxu0 0.0
    %166 = vmatpush1.msra.mxu0 0.0
    %167 = vmatprep.subr.mxu0 0.0
    %168 = vmatpush1.msra.mxu0 0.0
    %169 = vmatprep.subr.mxu0 0.0
    %170 = vmatpush1.msra.mxu0 0.0
    %171 = vmatprep.subr.mxu0 0.0
    %172 = vmatpush1.msra.mxu0 0.0
    %173 = vmatprep.subr.mxu0 0.0
    %174 = vmatpush1.msra.mxu0 0.0
    %175 = vmatprep.subr.mxu0 0.0
    %176 = vmatpush1.msra.mxu0 0.0
    %177 = vmatprep.subr.mxu0 0.0
    %178 = vmatpush1.msra.mxu0 0.0
    %179 = vmatprep.subr.mxu0 0.0
    %180 = vmatpush1.msra.mxu0 0.0
    %181 = vmatprep.subr.mxu0 0.0
    %182 = vmatpush1.msra.mxu0 0.0
    %183 = vmatprep.subr.mxu0 0.0
    %184 = vmatpush1.msra.mxu0 0.0
    %185 = vmatprep.subr.mxu0 0.0
    %186 = vmatpush1.msra.mxu0 0.0
    %187 = vmatprep.subr.mxu0 0.0
    %188 = vmatpush1.msra.mxu0 0.0
    %189 = vmatprep.subr.mxu0 0.0
    %190 = vmatpush1.msra.mxu0 0.0
    %191 = vmatprep.mubr.f32.mxu0 0.0
    %192 = vmatmul.mubr.f32.gmra.mrb[0].mxu0 %v125
    %v193 = vpop.f32.mrb[0].mxu0
    %v194 = vadd.f32 %v106, %v193
    %v195 = vpop.f32.mrb[0].mxu0
    %v196 = vadd.f32 %v110, %v195
    %197 = vdwg.mxu0
    %198 = vmatprep.subr.mxu0 %v89
    %199 = vmatpush1.msra.mxu0 %v88
    %200 = vmatprep.subr.mxu0 %v93
    %201 = vmatpush1.msra.mxu0 %v92
    %202 = vmatprep.subr.mxu0 %v97
    %203 = vmatpush1.msra.mxu0 %v96
    %204 = vmatprep.subr.mxu0 %v101
    %205 = vmatpush1.msra.mxu0 %v100
    %206 = vmatprep.subr.mxu0 0.0
    %207 = vmatpush1.msra.mxu0 0.0
    %208 = vmatprep.subr.mxu0 0.0
    %209 = vmatpush1.msra.mxu0 0.0
    %210 = vmatprep.subr.mxu0 0.0
    %211 = vmatpush1.msra.mxu0 0.0
    %212 = vmatprep.subr.mxu0 0.0
    %213 = vmatpush1.msra.mxu0 0.0
    %214 = vmatprep.subr.mxu0 0.0
    %215 = vmatpush1.msra.mxu0 0.0
    %216 = vmatprep.subr.mxu0 0.0
    %217 = vmatpush1.msra.mxu0 0.0
    %218 = vmatprep.subr.mxu0 0.0
    %219 = vmatpush1.msra.mxu0 0.0
    %220 = vmatprep.subr.mxu0 0.0
    %221 = vmatpush1.msra.mxu0 0.0
    %222 = vmatprep.subr.mxu0 0.0
    %223 = vmatpush1.msra.mxu0 0.0
    %224 = vmatprep.subr.mxu0 0.0
    %225 = vmatpush1.msra.mxu0 0.0
    %226 = vmatprep.subr.mxu0 0.0
    %227 = vmatpush1.msra.mxu0 0.0
    %228 = vmatprep.subr.mxu0 0.0
    %229 = vmatpush1.msra.mxu0 0.0
    %230 = vmatprep.subr.mxu0 0.0
    %231 = vmatpush1.msra.mxu0 0.0
    %232 = vmatprep.subr.mxu0 0.0
    %233 = vmatpush1.msra.mxu0 0.0
    %234 = vmatprep.subr.mxu0 0.0
    %235 = vmatpush1.msra.mxu0 0.0
    %236 = vmatprep.subr.mxu0 0.0
    %237 = vmatpush1.msra.mxu0 0.0
    %238 = vmatprep.subr.mxu0 0.0
    %239 = vmatpush1.msra.mxu0 0.0
    %240 = vmatprep.subr.mxu0 0.0
    %241 = vmatpush1.msra.mxu0 0.0
    %242 = vmatprep.subr.mxu0 0.0
    %243 = vmatpush1.msra.mxu0 0.0
    %244 = vmatprep.subr.mxu0 0.0
    %245 = vmatpush1.msra.mxu0 0.0
    %246 = vmatprep.subr.mxu0 0.0
    %247 = vmatpush1.msra.mxu0 0.0
    %248 = vmatprep.subr.mxu0 0.0
    %249 = vmatpush1.msra.mxu0 0.0
    %250 = vmatprep.subr.mxu0 0.0
    %251 = vmatpush1.msra.mxu0 0.0
    %252 = vmatprep.subr.mxu0 0.0
    %253 = vmatpush1.msra.mxu0 0.0
    %254 = vmatprep.subr.mxu0 0.0
    %255 = vmatpush1.msra.mxu0 0.0
    %256 = vmatprep.subr.mxu0 0.0
    %257 = vmatpush1.msra.mxu0 0.0
    %258 = vmatprep.subr.mxu0 0.0
    %259 = vmatpush1.msra.mxu0 0.0
    %260 = vmatprep.subr.mxu0 0.0
    %261 = vmatpush1.msra.mxu0 0.0
    %262 = vmatprep.mubr.f32.mxu0 0.0
    %263 = vmatmul.mubr.f32.gmra.mrb[0].mxu0 %v125
    %v264 = vpop.f32.mrb[0].mxu0
    %v265 = vadd.f32 %v114, %v264
    %v266 = vpop.f32.mrb[0].mxu0
    %v267 = vadd.f32 %v118, %v266
    %268 = vdwg.mxu0
    %v269 = vmax.f32 %v194, 0.0
    %v270 = vmax.f32 %v196, 0.0
    %v271 = vmax.f32 %v265, 0.0
    %v272 = vmax.f32 %v267, 0.0
    %s273 = scalar_lea.vmem [#allocation9], 1
    %v274 = vld [vmem:[%s273] ss:$4 sm:$0x3]
    %s275 = scalar_lea.vmem [#allocation9], 9
    %v276 = vld [vmem:[%s275] ss:$4 sm:$0x3]
    %v277 = vld [vmem:[#allocation6] sm:$0xff]
    %v278 = vld [vmem:[#allocation6 + $0x8] sm:$0xff]
    %v279 = vld [vmem:[#allocation6 + $0x10] sm:$0xff]
    %v280 = vld [vmem:[#allocation6 + $0x18] sm:$0xff]
    %v281 = vld [vmem:[#allocation6 + $0x20] sm:$0xff]
    %v282 = vld [vmem:[#allocation6 + $0x28] sm:$0xff]
    %v283 = vld [vmem:[#allocation6 + $0x30] sm:$0xff]
    %v284 = vld [vmem:[#allocation6 + $0x38] sm:$0xff]
    %v285 = vld [vmem:[#allocation6 + $0x40] sm:$0xff]
    %v286 = vld [vmem:[#allocation6 + $0x48] sm:$0xff]
    %v287 = vld [vmem:[#allocation6 + $0x50] sm:$0xff]
    %v288 = vld [vmem:[#allocation6 + $0x58] sm:$0xff]
    %v289 = vld [vmem:[#allocation6 + $0x60] sm:$0xff]
    %v290 = vld [vmem:[#allocation6 + $0x68] sm:$0xff]
    %v291 = vld [vmem:[#allocation6 + $0x70] sm:$0xff]
    %v292 = vld [vmem:[#allocation6 + $0x78] sm:$0xff]
    %v293 = vld [vmem:[#allocation6 + $0x80] sm:$0xff]
    %v294 = vld [vmem:[#allocation6 + $0x88] sm:$0xff]
    %v295 = vld [vmem:[#allocation6 + $0x90] sm:$0xff]
    %v296 = vld [vmem:[#allocation6 + $0x98] sm:$0xff]
    %v297 = vld [vmem:[#allocation6 + $0xa0] sm:$0xff]
    %v298 = vld [vmem:[#allocation6 + $0xa8] sm:$0xff]
    %v299 = vld [vmem:[#allocation6 + $0xb0] sm:$0xff]
    %v300 = vld [vmem:[#allocation6 + $0xb8] sm:$0xff]
    %v301 = vld [vmem:[#allocation6 + $0xc0] sm:$0xff]
    %v302 = vld [vmem:[#allocation6 + $0xc8] sm:$0xff]
    %v303 = vld [vmem:[#allocation6 + $0xd0] sm:$0xff]
    %v304 = vld [vmem:[#allocation6 + $0xd8] sm:$0xff]
    %v305 = vld [vmem:[#allocation6 + $0xe0] sm:$0xff]
    %v306 = vld [vmem:[#allocation6 + $0xe8] sm:$0xff]
    %v307 = vld [vmem:[#allocation6 + $0xf0] sm:$0xff]
    %v308 = vld [vmem:[#allocation6 + $0xf8] sm:$0xff]
    %v309 = vld [vmem:[#allocation6 + $0x100] sm:$0xff]
    %v310 = vld [vmem:[#allocation6 + $0x108] sm:$0xff]
    %v311 = vld [vmem:[#allocation6 + $0x110] sm:$0xff]
    %v312 = vld [vmem:[#allocation6 + $0x118] sm:$0xff]
    %v313 = vld [vmem:[#allocation6 + $0x120] sm:$0xff]
    %v314 = vld [vmem:[#allocation6 + $0x128] sm:$0xff]
    %v315 = vld [vmem:[#allocation6 + $0x130] sm:$0xff]
    %v316 = vld [vmem:[#allocation6 + $0x138] sm:$0xff]
    %v317 = vld [vmem:[#allocation6 + $0x140] sm:$0xff]
    %v318 = vld [vmem:[#allocation6 + $0x148] sm:$0xff]
    %v319 = vld [vmem:[#allocation6 + $0x150] sm:$0xff]
    %v320 = vld [vmem:[#allocation6 + $0x158] sm:$0xff]
    %v321 = vld [vmem:[#allocation6 + $0x160] sm:$0xff]
    %v322 = vld [vmem:[#allocation6 + $0x168] sm:$0xff]
    %v323 = vld [vmem:[#allocation6 + $0x170] sm:$0xff]
    %v324 = vld [vmem:[#allocation6 + $0x178] sm:$0xff]
    %v325 = vld [vmem:[#allocation6 + $0x180] sm:$0xff]
    %v326 = vld [vmem:[#allocation6 + $0x188] sm:$0xff]
    %v327 = vld [vmem:[#allocation6 + $0x190] sm:$0xff]
    %v328 = vld [vmem:[#allocation6 + $0x198] sm:$0xff]
    %v329 = vld [vmem:[#allocation6 + $0x1a0] sm:$0xff]
    %v330 = vld [vmem:[#allocation6 + $0x1a8] sm:$0xff]
    %v331 = vld [vmem:[#allocation6 + $0x1b0] sm:$0xff]
    %v332 = vld [vmem:[#allocation6 + $0x1b8] sm:$0xff]
    %v333 = vld [vmem:[#allocation6 + $0x1c0] sm:$0xff]
    %v334 = vld [vmem:[#allocation6 + $0x1c8] sm:$0xff]
    %v335 = vld [vmem:[#allocation6 + $0x1d0] sm:$0xff]
    %v336 = vld [vmem:[#allocation6 + $0x1d8] sm:$0xff]
    %v337 = vld [vmem:[#allocation6 + $0x1e0] sm:$0xff]
    %v338 = vld [vmem:[#allocation6 + $0x1e8] sm:$0xff]
    %v339 = vld [vmem:[#allocation6 + $0x1f0] sm:$0xff]
    %v340 = vld [vmem:[#allocation6 + $0x1f8] sm:$0xff]
    %v342 = vlaneseq
    %v343 = vshrl.u32 %v342, 7
    %v344 = vsub.s32 0, %v343
    %v345 = vrot.slane %v274, %v344
    %v346 = vlaneseq
    %v347 = vshrl.u32 %v346, 7
    %v348 = vsub.s32 1, %v347
    %v349 = vrot.slane %v274, %v348
    %352 = vmatprep.subr.mxu0 %v278
    %353 = vmatpush1.msra.mxu0 %v277
    %354 = vmatprep.subr.mxu0 %v280
    %355 = vmatpush1.msra.mxu0 %v279
    %356 = vmatprep.subr.mxu0 %v282
    %357 = vmatpush1.msra.mxu0 %v281
    %358 = vmatprep.subr.mxu0 %v284
    %359 = vmatpush1.msra.mxu0 %v283
    %360 = vmatprep.subr.mxu0 %v286
    %361 = vmatpush1.msra.mxu0 %v285
    %362 = vmatprep.subr.mxu0 %v288
    %363 = vmatpush1.msra.mxu0 %v287
    %364 = vmatprep.subr.mxu0 %v290
    %365 = vmatpush1.msra.mxu0 %v289
    %366 = vmatprep.subr.mxu0 %v292
    %367 = vmatpush1.msra.mxu0 %v291
    %368 = vmatprep.subr.mxu0 %v294
    %369 = vmatpush1.msra.mxu0 %v293
    %370 = vmatprep.subr.mxu0 %v296
    %371 = vmatpush1.msra.mxu0 %v295
    %372 = vmatprep.subr.mxu0 %v298
    %373 = vmatpush1.msra.mxu0 %v297
    %374 = vmatprep.subr.mxu0 %v300
    %375 = vmatpush1.msra.mxu0 %v299
    %376 = vmatprep.subr.mxu0 %v302
    %377 = vmatpush1.msra.mxu0 %v301
    %378 = vmatprep.subr.mxu0 %v304
    %379 = vmatpush1.msra.mxu0 %v303
    %380 = vmatprep.subr.mxu0 %v306
    %381 = vmatpush1.msra.mxu0 %v305
    %382 = vmatprep.subr.mxu0 %v308
    %383 = vmatpush1.msra.mxu0 %v307
    %384 = vmatprep.subr.mxu0 %v310
    %385 = vmatpush1.msra.mxu0 %v309
    %386 = vmatprep.subr.mxu0 %v312
    %387 = vmatpush1.msra.mxu0 %v311
    %388 = vmatprep.subr.mxu0 %v314
    %389 = vmatpush1.msra.mxu0 %v313
    %390 = vmatprep.subr.mxu0 %v316
    %391 = vmatpush1.msra.mxu0 %v315
    %392 = vmatprep.subr.mxu0 %v318
    %393 = vmatpush1.msra.mxu0 %v317
    %394 = vmatprep.subr.mxu0 %v320
    %395 = vmatpush1.msra.mxu0 %v319
    %396 = vmatprep.subr.mxu0 %v322
    %397 = vmatpush1.msra.mxu0 %v321
    %398 = vmatprep.subr.mxu0 %v324
    %399 = vmatpush1.msra.mxu0 %v323
    %400 = vmatprep.subr.mxu0 %v326
    %401 = vmatpush1.msra.mxu0 %v325
    %402 = vmatprep.subr.mxu0 %v328
    %403 = vmatpush1.msra.mxu0 %v327
    %404 = vmatprep.subr.mxu0 %v330
    %405 = vmatpush1.msra.mxu0 %v329
    %406 = vmatprep.subr.mxu0 %v332
    %407 = vmatpush1.msra.mxu0 %v331
    %408 = vmatprep.subr.mxu0 %v334
    %409 = vmatpush1.msra.mxu0 %v333
    %410 = vmatprep.subr.mxu0 %v336
    %411 = vmatpush1.msra.mxu0 %v335
    %412 = vmatprep.subr.mxu0 %v338
    %413 = vmatpush1.msra.mxu0 %v337
    %414 = vmatprep.subr.mxu0 %v340
    %415 = vmatpush1.msra.mxu0 %v339
    %416 = vmatprep.mubr.f32.mxu0 %v270
    %417 = vmatmul.mubr.f32.gmra.mrb[0].mxu0 %v269
    %v418 = vpop.f32.mrb[0].mxu0
    %v419 = vadd.f32 %v345, %v418
    %v420 = vpop.f32.mrb[0].mxu0
    %v421 = vadd.f32 %v349, %v420
    %422 = vdwg.mxu0
    %v423 = vmax.f32 %v419, 0.0
    %v424 = vmax.f32 %v421, 0.0
    %s425 = scalar_lea.vmem [#allocation6], 512
    %v426 = vld [vmem:[%s425] sm:$0xff]
    %v427 = vld [vmem:[%s425 + $0x8] sm:$0xff]
    %v428 = vld [vmem:[%s425 + $0x10] sm:$0xff]
    %v429 = vld [vmem:[%s425 + $0x18] sm:$0xff]
    %v430 = vld [vmem:[%s425 + $0x20] sm:$0xff]
    %v431 = vld [vmem:[%s425 + $0x28] sm:$0xff]
    %v432 = vld [vmem:[%s425 + $0x30] sm:$0xff]
    %v433 = vld [vmem:[%s425 + $0x38] sm:$0xff]
    %v434 = vld [vmem:[%s425 + $0x40] sm:$0xff]
    %v435 = vld [vmem:[%s425 + $0x48] sm:$0xff]
    %v436 = vld [vmem:[%s425 + $0x50] sm:$0xff]
    %v437 = vld [vmem:[%s425 + $0x58] sm:$0xff]
    %v438 = vld [vmem:[%s425 + $0x60] sm:$0xff]
    %v439 = vld [vmem:[%s425 + $0x68] sm:$0xff]
    %v440 = vld [vmem:[%s425 + $0x70] sm:$0xff]
    %v441 = vld [vmem:[%s425 + $0x78] sm:$0xff]
    %v442 = vld [vmem:[%s425 + $0x80] sm:$0xff]
    %v443 = vld [vmem:[%s425 + $0x88] sm:$0xff]
    %v444 = vld [vmem:[%s425 + $0x90] sm:$0xff]
    %v445 = vld [vmem:[%s425 + $0x98] sm:$0xff]
    %v446 = vld [vmem:[%s425 + $0xa0] sm:$0xff]
    %v447 = vld [vmem:[%s425 + $0xa8] sm:$0xff]
    %v448 = vld [vmem:[%s425 + $0xb0] sm:$0xff]
    %v449 = vld [vmem:[%s425 + $0xb8] sm:$0xff]
    %v450 = vld [vmem:[%s425 + $0xc0] sm:$0xff]
    %v451 = vld [vmem:[%s425 + $0xc8] sm:$0xff]
    %v452 = vld [vmem:[%s425 + $0xd0] sm:$0xff]
    %v453 = vld [vmem:[%s425 + $0xd8] sm:$0xff]
    %v454 = vld [vmem:[%s425 + $0xe0] sm:$0xff]
    %v455 = vld [vmem:[%s425 + $0xe8] sm:$0xff]
    %v456 = vld [vmem:[%s425 + $0xf0] sm:$0xff]
    %v457 = vld [vmem:[%s425 + $0xf8] sm:$0xff]
    %v458 = vld [vmem:[%s425 + $0x100] sm:$0xff]
    %v459 = vld [vmem:[%s425 + $0x108] sm:$0xff]
    %v460 = vld [vmem:[%s425 + $0x110] sm:$0xff]
    %v461 = vld [vmem:[%s425 + $0x118] sm:$0xff]
    %v462 = vld [vmem:[%s425 + $0x120] sm:$0xff]
    %v463 = vld [vmem:[%s425 + $0x128] sm:$0xff]
    %v464 = vld [vmem:[%s425 + $0x130] sm:$0xff]
    %v465 = vld [vmem:[%s425 + $0x138] sm:$0xff]
    %v466 = vld [vmem:[%s425 + $0x140] sm:$0xff]
    %v467 = vld [vmem:[%s425 + $0x148] sm:$0xff]
    %v468 = vld [vmem:[%s425 + $0x150] sm:$0xff]
    %v469 = vld [vmem:[%s425 + $0x158] sm:$0xff]
    %v470 = vld [vmem:[%s425 + $0x160] sm:$0xff]
    %v471 = vld [vmem:[%s425 + $0x168] sm:$0xff]
    %v472 = vld [vmem:[%s425 + $0x170] sm:$0xff]
    %v473 = vld [vmem:[%s425 + $0x178] sm:$0xff]
    %v474 = vld [vmem:[%s425 + $0x180] sm:$0xff]
    %v475 = vld [vmem:[%s425 + $0x188] sm:$0xff]
    %v476 = vld [vmem:[%s425 + $0x190] sm:$0xff]
    %v477 = vld [vmem:[%s425 + $0x198] sm:$0xff]
    %v478 = vld [vmem:[%s425 + $0x1a0] sm:$0xff]
    %v479 = vld [vmem:[%s425 + $0x1a8] sm:$0xff]
    %v480 = vld [vmem:[%s425 + $0x1b0] sm:$0xff]
    %v481 = vld [vmem:[%s425 + $0x1b8] sm:$0xff]
    %v482 = vld [vmem:[%s425 + $0x1c0] sm:$0xff]
    %v483 = vld [vmem:[%s425 + $0x1c8] sm:$0xff]
    %v484 = vld [vmem:[%s425 + $0x1d0] sm:$0xff]
    %v485 = vld [vmem:[%s425 + $0x1d8] sm:$0xff]
    %v486 = vld [vmem:[%s425 + $0x1e0] sm:$0xff]
    %v487 = vld [vmem:[%s425 + $0x1e8] sm:$0xff]
    %v488 = vld [vmem:[%s425 + $0x1f0] sm:$0xff]
    %v489 = vld [vmem:[%s425 + $0x1f8] sm:$0xff]
    %v491 = vlaneseq
    %v492 = vshrl.u32 %v491, 7
    %v493 = vsub.s32 0, %v492
    %v494 = vrot.slane %v276, %v493
    %v495 = vlaneseq
    %v496 = vshrl.u32 %v495, 7
    %v497 = vsub.s32 1, %v496
    %v498 = vrot.slane %v276, %v497
    %501 = vmatprep.subr.mxu0 %v427
    %502 = vmatpush1.msra.mxu0 %v426
    %503 = vmatprep.subr.mxu0 %v429
    %504 = vmatpush1.msra.mxu0 %v428
    %505 = vmatprep.subr.mxu0 %v431
    %506 = vmatpush1.msra.mxu0 %v430
    %507 = vmatprep.subr.mxu0 %v433
    %508 = vmatpush1.msra.mxu0 %v432
    %509 = vmatprep.subr.mxu0 %v435
    %510 = vmatpush1.msra.mxu0 %v434
    %511 = vmatprep.subr.mxu0 %v437
    %512 = vmatpush1.msra.mxu0 %v436
    %513 = vmatprep.subr.mxu0 %v439
    %514 = vmatpush1.msra.mxu0 %v438
    %515 = vmatprep.subr.mxu0 %v441
    %516 = vmatpush1.msra.mxu0 %v440
    %517 = vmatprep.subr.mxu0 %v443
    %518 = vmatpush1.msra.mxu0 %v442
    %519 = vmatprep.subr.mxu0 %v445
    %520 = vmatpush1.msra.mxu0 %v444
    %521 = vmatprep.subr.mxu0 %v447
    %522 = vmatpush1.msra.mxu0 %v446
    %523 = vmatprep.subr.mxu0 %v449
    %524 = vmatpush1.msra.mxu0 %v448
    %525 = vmatprep.subr.mxu0 %v451
    %526 = vmatpush1.msra.mxu0 %v450
    %527 = vmatprep.subr.mxu0 %v453
    %528 = vmatpush1.msra.mxu0 %v452
    %529 = vmatprep.subr.mxu0 %v455
    %530 = vmatpush1.msra.mxu0 %v454
    %531 = vmatprep.subr.mxu0 %v457
    %532 = vmatpush1.msra.mxu0 %v456
    %533 = vmatprep.subr.mxu0 %v459
    %534 = vmatpush1.msra.mxu0 %v458
    %535 = vmatprep.subr.mxu0 %v461
    %536 = vmatpush1.msra.mxu0 %v460
    %537 = vmatprep.subr.mxu0 %v463
    %538 = vmatpush1.msra.mxu0 %v462
    %539 = vmatprep.subr.mxu0 %v465
    %540 = vmatpush1.msra.mxu0 %v464
    %541 = vmatprep.subr.mxu0 %v467
    %542 = vmatpush1.msra.mxu0 %v466
    %543 = vmatprep.subr.mxu0 %v469
    %544 = vmatpush1.msra.mxu0 %v468
    %545 = vmatprep.subr.mxu0 %v471
    %546 = vmatpush1.msra.mxu0 %v470
    %547 = vmatprep.subr.mxu0 %v473
    %548 = vmatpush1.msra.mxu0 %v472
    %549 = vmatprep.subr.mxu0 %v475
    %550 = vmatpush1.msra.mxu0 %v474
    %551 = vmatprep.subr.mxu0 %v477
    %552 = vmatpush1.msra.mxu0 %v476
    %553 = vmatprep.subr.mxu0 %v479
    %554 = vmatpush1.msra.mxu0 %v478
    %555 = vmatprep.subr.mxu0 %v481
    %556 = vmatpush1.msra.mxu0 %v480
    %557 = vmatprep.subr.mxu0 %v483
    %558 = vmatpush1.msra.mxu0 %v482
    %559 = vmatprep.subr.mxu0 %v485
    %560 = vmatpush1.msra.mxu0 %v484
    %561 = vmatprep.subr.mxu0 %v487
    %562 = vmatpush1.msra.mxu0 %v486
    %563 = vmatprep.subr.mxu0 %v489
    %564 = vmatpush1.msra.mxu0 %v488
    %565 = vmatprep.mubr.f32.mxu0 %v272
    %566 = vmatmul.mubr.f32.gmra.mrb[0].mxu0 %v271
    %v567 = vpop.f32.mrb[0].mxu0
    %v568 = vadd.f32 %v494, %v567
    %v569 = vpop.f32.mrb[0].mxu0
    %v570 = vadd.f32 %v498, %v569
    %571 = vdwg.mxu0
    %v572 = vmax.f32 %v568, 0.0
    %v573 = vmax.f32 %v570, 0.0
    %v574 = vld [vmem:[#allocation9 + $0x2] sm:$0x1]
    %v575 = vld [vmem:[#allocation7] sm:$0xff]
    %v576 = vld [vmem:[#allocation7 + $0x8] sm:$0xff]
    %v577 = vld [vmem:[#allocation7 + $0x10] sm:$0xff]
    %v578 = vld [vmem:[#allocation7 + $0x18] sm:$0xff]
    %v579 = vld [vmem:[#allocation7 + $0x20] sm:$0xff]
    %v580 = vld [vmem:[#allocation7 + $0x28] sm:$0xff]
    %v581 = vld [vmem:[#allocation7 + $0x30] sm:$0xff]
    %v582 = vld [vmem:[#allocation7 + $0x38] sm:$0xff]
    %v583 = vld [vmem:[#allocation7 + $0x40] sm:$0xff]
    %v584 = vld [vmem:[#allocation7 + $0x48] sm:$0xff]
    %v585 = vld [vmem:[#allocation7 + $0x50] sm:$0xff]
    %v586 = vld [vmem:[#allocation7 + $0x58] sm:$0xff]
    %v587 = vld [vmem:[#allocation7 + $0x60] sm:$0xff]
    %v588 = vld [vmem:[#allocation7 + $0x68] sm:$0xff]
    %v589 = vld [vmem:[#allocation7 + $0x70] sm:$0xff]
    %v590 = vld [vmem:[#allocation7 + $0x78] sm:$0xff]
    %v591 = vld [vmem:[#allocation7 + $0x80] sm:$0xff]
    %v592 = vld [vmem:[#allocation7 + $0x88] sm:$0xff]
    %v593 = vld [vmem:[#allocation7 + $0x90] sm:$0xff]
    %v594 = vld [vmem:[#allocation7 + $0x98] sm:$0xff]
    %v595 = vld [vmem:[#allocation7 + $0xa0] sm:$0xff]
    %v596 = vld [vmem:[#allocation7 + $0xa8] sm:$0xff]
    %v597 = vld [vmem:[#allocation7 + $0xb0] sm:$0xff]
    %v598 = vld [vmem:[#allocation7 + $0xb8] sm:$0xff]
    %v599 = vld [vmem:[#allocation7 + $0xc0] sm:$0xff]
    %v600 = vld [vmem:[#allocation7 + $0xc8] sm:$0xff]
    %v601 = vld [vmem:[#allocation7 + $0xd0] sm:$0xff]
    %v602 = vld [vmem:[#allocation7 + $0xd8] sm:$0xff]
    %v603 = vld [vmem:[#allocation7 + $0xe0] sm:$0xff]
    %v604 = vld [vmem:[#allocation7 + $0xe8] sm:$0xff]
    %v605 = vld [vmem:[#allocation7 + $0xf0] sm:$0xff]
    %v606 = vld [vmem:[#allocation7 + $0xf8] sm:$0xff]
    %v607 = vld [vmem:[#allocation7 + $0x100] sm:$0xff]
    %v608 = vld [vmem:[#allocation7 + $0x108] sm:$0xff]
    %v609 = vld [vmem:[#allocation7 + $0x110] sm:$0xff]
    %v610 = vld [vmem:[#allocation7 + $0x118] sm:$0xff]
    %v611 = vld [vmem:[#allocation7 + $0x120] sm:$0xff]
    %v612 = vld [vmem:[#allocation7 + $0x128] sm:$0xff]
    %v613 = vld [vmem:[#allocation7 + $0x130] sm:$0xff]
    %v614 = vld [vmem:[#allocation7 + $0x138] sm:$0xff]
    %v615 = vld [vmem:[#allocation7 + $0x140] sm:$0xff]
    %v616 = vld [vmem:[#allocation7 + $0x148] sm:$0xff]
    %v617 = vld [vmem:[#allocation7 + $0x150] sm:$0xff]
    %v618 = vld [vmem:[#allocation7 + $0x158] sm:$0xff]
    %v619 = vld [vmem:[#allocation7 + $0x160] sm:$0xff]
    %v620 = vld [vmem:[#allocation7 + $0x168] sm:$0xff]
    %v621 = vld [vmem:[#allocation7 + $0x170] sm:$0xff]
    %v622 = vld [vmem:[#allocation7 + $0x178] sm:$0xff]
    %v623 = vld [vmem:[#allocation7 + $0x180] sm:$0xff]
    %v624 = vld [vmem:[#allocation7 + $0x188] sm:$0xff]
    %v625 = vld [vmem:[#allocation7 + $0x190] sm:$0xff]
    %v626 = vld [vmem:[#allocation7 + $0x198] sm:$0xff]
    %v627 = vld [vmem:[#allocation7 + $0x1a0] sm:$0xff]
    %v628 = vld [vmem:[#allocation7 + $0x1a8] sm:$0xff]
    %v629 = vld [vmem:[#allocation7 + $0x1b0] sm:$0xff]
    %v630 = vld [vmem:[#allocation7 + $0x1b8] sm:$0xff]
    %v631 = vld [vmem:[#allocation7 + $0x1c0] sm:$0xff]
    %v632 = vld [vmem:[#allocation7 + $0x1c8] sm:$0xff]
    %v633 = vld [vmem:[#allocation7 + $0x1d0] sm:$0xff]
    %v634 = vld [vmem:[#allocation7 + $0x1d8] sm:$0xff]
    %v635 = vld [vmem:[#allocation7 + $0x1e0] sm:$0xff]
    %v636 = vld [vmem:[#allocation7 + $0x1e8] sm:$0xff]
    %v637 = vld [vmem:[#allocation7 + $0x1f0] sm:$0xff]
    %v638 = vld [vmem:[#allocation7 + $0x1f8] sm:$0xff]
    %v639 = vlaneseq
    %v640 = vshrl.u32 %v639, 7
    %v641 = vsub.s32 0, %v640
    %v642 = vrot.slane %v574, %v641
    %643 = vmatprep.subr.mxu0 0.0
    %644 = vmatpush1.msra.mxu0 %v575
    %645 = vmatprep.subr.mxu0 0.0
    %646 = vmatpush1.msra.mxu0 %v576
    %647 = vmatprep.subr.mxu0 0.0
    %648 = vmatpush1.msra.mxu0 %v577
    %649 = vmatprep.subr.mxu0 0.0
    %650 = vmatpush1.msra.mxu0 %v578
    %651 = vmatprep.subr.mxu0 0.0
    %652 = vmatpush1.msra.mxu0 %v579
    %653 = vmatprep.subr.mxu0 0.0
    %654 = vmatpush1.msra.mxu0 %v580
    %655 = vmatprep.subr.mxu0 0.0
    %656 = vmatpush1.msra.mxu0 %v581
    %657 = vmatprep.subr.mxu0 0.0
    %658 = vmatpush1.msra.mxu0 %v582
    %659 = vmatprep.subr.mxu0 0.0
    %660 = vmatpush1.msra.mxu0 %v583
    %661 = vmatprep.subr.mxu0 0.0
    %662 = vmatpush1.msra.mxu0 %v584
    %663 = vmatprep.subr.mxu0 0.0
    %664 = vmatpush1.msra.mxu0 %v585
    %665 = vmatprep.subr.mxu0 0.0
    %666 = vmatpush1.msra.mxu0 %v586
    %667 = vmatprep.subr.mxu0 0.0
    %668 = vmatpush1.msra.mxu0 %v587
    %669 = vmatprep.subr.mxu0 0.0
    %670 = vmatpush1.msra.mxu0 %v588
    %671 = vmatprep.subr.mxu0 0.0
    %672 = vmatpush1.msra.mxu0 %v589
    %673 = vmatprep.subr.mxu0 0.0
    %674 = vmatpush1.msra.mxu0 %v590
    %675 = vmatprep.subr.mxu0 0.0
    %676 = vmatpush1.msra.mxu0 %v591
    %677 = vmatprep.subr.mxu0 0.0
    %678 = vmatpush1.msra.mxu0 %v592
    %679 = vmatprep.subr.mxu0 0.0
    %680 = vmatpush1.msra.mxu0 %v593
    %681 = vmatprep.subr.mxu0 0.0
    %682 = vmatpush1.msra.mxu0 %v594
    %683 = vmatprep.subr.mxu0 0.0
    %684 = vmatpush1.msra.mxu0 %v595
    %685 = vmatprep.subr.mxu0 0.0
    %686 = vmatpush1.msra.mxu0 %v596
    %687 = vmatprep.subr.mxu0 0.0
    %688 = vmatpush1.msra.mxu0 %v597
    %689 = vmatprep.subr.mxu0 0.0
    %690 = vmatpush1.msra.mxu0 %v598
    %691 = vmatprep.subr.mxu0 0.0
    %692 = vmatpush1.msra.mxu0 %v599
    %693 = vmatprep.subr.mxu0 0.0
    %694 = vmatpush1.msra.mxu0 %v600
    %695 = vmatprep.subr.mxu0 0.0
    %696 = vmatpush1.msra.mxu0 %v601
    %697 = vmatprep.subr.mxu0 0.0
    %698 = vmatpush1.msra.mxu0 %v602
    %699 = vmatprep.subr.mxu0 0.0
    %700 = vmatpush1.msra.mxu0 %v603
    %701 = vmatprep.subr.mxu0 0.0
    %702 = vmatpush1.msra.mxu0 %v604
    %703 = vmatprep.subr.mxu0 0.0
    %704 = vmatpush1.msra.mxu0 %v605
    %705 = vmatprep.subr.mxu0 0.0
    %706 = vmatpush1.msra.mxu0 %v606
    %707 = vmatprep.mubr.f32.mxu0 %v424
    %708 = vmatmul.mubr.f32.gmra.mrb[0].mxu0 %v423
    %v709 = vpop.f32.mrb[0].mxu0
    %v710 = vadd.f32 %v642, %v709
    %v711 = vpop.f32.mrb[0].mxu0
    %712 = vdwg.mxu0
    %713 = vmatprep.subr.mxu0 0.0
    %714 = vmatpush1.msra.mxu0 %v607
    %715 = vmatprep.subr.mxu0 0.0
    %716 = vmatpush1.msra.mxu0 %v608
    %717 = vmatprep.subr.mxu0 0.0
    %718 = vmatpush1.msra.mxu0 %v609
    %719 = vmatprep.subr.mxu0 0.0
    %720 = vmatpush1.msra.mxu0 %v610
    %721 = vmatprep.subr.mxu0 0.0
    %722 = vmatpush1.msra.mxu0 %v611
    %723 = vmatprep.subr.mxu0 0.0
    %724 = vmatpush1.msra.mxu0 %v612
    %725 = vmatprep.subr.mxu0 0.0
    %726 = vmatpush1.msra.mxu0 %v613
    %727 = vmatprep.subr.mxu0 0.0
    %728 = vmatpush1.msra.mxu0 %v614
    %729 = vmatprep.subr.mxu0 0.0
    %730 = vmatpush1.msra.mxu0 %v615
    %731 = vmatprep.subr.mxu0 0.0
    %732 = vmatpush1.msra.mxu0 %v616
    %733 = vmatprep.subr.mxu0 0.0
    %734 = vmatpush1.msra.mxu0 %v617
    %735 = vmatprep.subr.mxu0 0.0
    %736 = vmatpush1.msra.mxu0 %v618
    %737 = vmatprep.subr.mxu0 0.0
    %738 = vmatpush1.msra.mxu0 %v619
    %739 = vmatprep.subr.mxu0 0.0
    %740 = vmatpush1.msra.mxu0 %v620
    %741 = vmatprep.subr.mxu0 0.0
    %742 = vmatpush1.msra.mxu0 %v621
    %743 = vmatprep.subr.mxu0 0.0
    %744 = vmatpush1.msra.mxu0 %v622
    %745 = vmatprep.subr.mxu0 0.0
    %746 = vmatpush1.msra.mxu0 %v623
    %747 = vmatprep.subr.mxu0 0.0
    %748 = vmatpush1.msra.mxu0 %v624
    %749 = vmatprep.subr.mxu0 0.0
    %750 = vmatpush1.msra.mxu0 %v625
    %751 = vmatprep.subr.mxu0 0.0
    %752 = vmatpush1.msra.mxu0 %v626
    %753 = vmatprep.subr.mxu0 0.0
    %754 = vmatpush1.msra.mxu0 %v627
    %755 = vmatprep.subr.mxu0 0.0
    %756 = vmatpush1.msra.mxu0 %v628
    %757 = vmatprep.subr.mxu0 0.0
    %758 = vmatpush1.msra.mxu0 %v629
    %759 = vmatprep.subr.mxu0 0.0
    %760 = vmatpush1.msra.mxu0 %v630
    %761 = vmatprep.subr.mxu0 0.0
    %762 = vmatpush1.msra.mxu0 %v631
    %763 = vmatprep.subr.mxu0 0.0
    %764 = vmatpush1.msra.mxu0 %v632
    %765 = vmatprep.subr.mxu0 0.0
    %766 = vmatpush1.msra.mxu0 %v633
    %767 = vmatprep.subr.mxu0 0.0
    %768 = vmatpush1.msra.mxu0 %v634
    %769 = vmatprep.subr.mxu0 0.0
    %770 = vmatpush1.msra.mxu0 %v635
    %771 = vmatprep.subr.mxu0 0.0
    %772 = vmatpush1.msra.mxu0 %v636
    %773 = vmatprep.subr.mxu0 0.0
    %774 = vmatpush1.msra.mxu0 %v637
    %775 = vmatprep.subr.mxu0 0.0
    %776 = vmatpush1.msra.mxu0 %v638
    %777 = vmatprep.mubr.f32.mxu0 %v573
    %778 = vmatmul.mubr.f32.gmra.mrb[0].mxu0 %v572
    %v779 = vpop.f32.mrb[0].mxu0
    %v780 = vadd.f32 %v710, %v779
    %v781 = vpop.f32.mrb[0].mxu0
    %782 = vdwg.mxu0
    %v783 = vlaneseq
    %v784 = vand.u32 %v783, 127
    %vm785 = vcmp.lt.s32.totalorder %v784, 8
    %v786 = vsel %vm785, %v780, -inf
    %787 = vmax.xlane.f32.xlu0 %v786
    %v788 = vpop.xlane.xlu0 %787
    %v789 = vsub.f32 %v786, %v788
    %v790 = vmul.f32 %v789, 1.442695
    %v791 = vpow.pop %v790
    %792 = vadd.xlane.f32.xlu0 %v791
    %v793 = vpop.xlane.xlu0 %792
    %v794 = vrcp.pop %v793
    %v795 = vmul.f32 %v791, %v794
    %vm796 = vcmp.eq.s32.totalorder %v784, 8
    %v797 = vsel %vm796, %v780, 0.0
    %v798 = vsel %vm785, %v795, %v797
    %799 = vst [vmem:[%s5] sm:$0xff] %v798
    // Predicated region
    $region42: #{ppo_split_forward.1} parent=1 // pred_check
      _
    $region43: #{ppo_split_forward.1} parent=1 // pred_check_branch
      %801 = sbr.rel (0) target = $region45
    $region44: #{ppo_split_forward.1} parent=1 // pred_region
      _
    $region45: #{ppo_split_forward.1} parent=1 // pred_fallthru
      _
    // Predicated region
    $region46: #{ppo_split_forward.1} parent=1 // pred_check
      _
    $region47: #{ppo_split_forward.1} parent=1 // pred_check_branch
      %803 = sbr.rel (0) target = $region49
    $region48: #{ppo_split_forward.1} parent=1 // pred_region
      _
    $region49: #{ppo_split_forward.1} parent=1 // pred_fallthru
      _
    %804 = vsyncpa [#allocation3], 1
    %805 = vsyncpa [#allocation5], 1
    %806 = vsyncpa [#allocation8], 1

</llo_original>
